<compile_context>
chip_gen: v6e
topology: v6e:2x2x1
jax: 0.10.0
libtpu: 0.0.40
codegen_flags: <defaults>
</compile_context>

<pallas_src>
import functools

import jax
import jax.numpy as jnp
from jax import lax
from jax.experimental import pallas as pl
from jax.experimental.pallas import tpu as pltpu

_LANE = 128
_SUBLANE = 8
_CHUNK_ROWS = 16            # one bf16 vreg / two f32 vregs per input per chunk
_ROW_ALIGN = 16             # block_rows multiple of 16: valid tile for f32 & bf16
_TARGET_BLOCK_ROWS = 2048   # (2048,128) f32 block = 1 MiB; 4 MiB double-buffered
_SMALL_N = _LANE * 512      # <= 64K elements -> single-block scalar-output path


def _round_up(a: int, b: int) -> int:
    return -(-a // b) * b


def _block_loss_sum(x_ref, z_ref, *, block_rows, real_label, fake_label,
                    n_valid, needs_mask, block_base):
    """Sum of BCE(x,real)+BCE(z,fake) over this block as an (8,128) f32 tile.

    Chunked accumulation: only one accumulator tile stays live instead of a
    materialized (block_rows,128) intermediate.
    """
    assert block_rows % _CHUNK_ROWS == 0 and _CHUNK_ROWS == 2 * _SUBLANE
    nchunks = block_rows // _CHUNK_ROWS

    if needs_mask:
        # Hoisted once (JAX does not CSE broadcasts inside the loop).
        row = lax.broadcasted_iota(jnp.int32, (_CHUNK_ROWS, _LANE), 0)
        lane = lax.broadcasted_iota(jnp.int32, (_CHUNK_ROWS, _LANE), 1)
        elem0 = block_base + row * _LANE + lane
    else:
        elem0 = None

    def body(c, acc):
        r0 = pl.multiple_of(c * _CHUNK_ROWS, _CHUNK_ROWS)
        x = x_ref[pl.ds(r0, _CHUNK_ROWS), :].astype(jnp.float32)
        z = z_ref[pl.ds(r0, _CHUNK_ROWS), :].astype(jnp.float32)
        # Numerically stable BCEWithLogits (PyTorch form), both terms fused:
        #   max(x,0) - x*yr + max(z,0) - z*yf + log((1+e^-|x|)*(1+e^-|z|))
        # -> 2 exp + 1 log per element-pair on the EUP.
        ex = jnp.exp(-jnp.abs(x))
        ez = jnp.exp(-jnp.abs(z))
        vals = (jnp.maximum(x, 0.0) - x * real_label
                + jnp.maximum(z, 0.0) - z * fake_label
                + jnp.log((1.0 + ex) * (1.0 + ez)))
        if needs_mask:
            elem = elem0 + c * (_CHUNK_ROWS * _LANE)
            vals = jnp.where(elem < n_valid, vals, 0.0)
        # Fold the 16-row chunk down to one (8,128) tile and accumulate.
        return acc + vals[:_SUBLANE] + vals[_SUBLANE:]

    return lax.fori_loop(0, nchunks, body,
                         jnp.zeros((_SUBLANE, _LANE), jnp.float32),
                         unroll=min(8, nchunks))


def _make_partial_kernel(real_label, fake_label, n_valid, block_rows, needs_mask):
    def kernel(x_ref, z_ref, out_ref):
        base = pl.program_id(0) * (block_rows * _LANE)
        acc = _block_loss_sum(
            x_ref, z_ref, block_rows=block_rows, real_label=real_label,
            fake_label=fake_label, n_valid=n_valid, needs_mask=needs_mask,
            block_base=base)
        out_ref[...] = acc[None]
    return kernel


def _make_scalar_kernel(real_label, fake_label, n_valid, rows, needs_mask, scale):
    def kernel(x_ref, z_ref, out_ref):
        acc = _block_loss_sum(
            x_ref, z_ref, block_rows=rows, real_label=real_label,
            fake_label=fake_label, n_valid=n_valid, needs_mask=needs_mask,
            block_base=0)
        out_ref[0, 0] = jnp.sum(acc) * scale
    return kernel


@functools.partial(jax.jit, static_argnames=("fake_label", "real_label"))
def gan_discriminator_loss(d_x, d_g_z, fake_label: float = 0.0, real_label: float = 1.0):
    # NOTE: the PyTorch module allows d_x / d_g_z of different shapes (two
    # independent means); this kernel assumes the usual matching-shape case.
    assert d_x.shape == d_g_z.shape, "kernel assumes matching logit shapes"
    n = int(d_x.size)
    assert n > 0, "empty logit tensors are not supported"
    real_label = float(real_label)
    fake_label = float(fake_label)

    x = d_x.reshape(-1)
    z = d_g_z.reshape(-1)

    if n <= _SMALL_N:
        # ---- Small-input fast path: one block, scalar (1,1) SMEM output. ----
        padded = _round_up(n, _CHUNK_ROWS * _LANE)
        if padded != n:  # tiny (< 2048-element) pad, only for ragged sizes
            x = jnp.pad(x, (0, padded - n))
            z = jnp.pad(z, (0, padded - n))
        rows = padded // _LANE
        needs_mask = padded != n
        kernel = _make_scalar_kernel(real_label, fake_label, n, rows,
                                     needs_mask, 0.5 / n)
        out = pl.pallas_call(
            kernel,
            out_shape=jax.ShapeDtypeStruct((1, 1), jnp.float32),
            in_specs=[pl.BlockSpec(memory_space=pltpu.MemorySpace.VMEM)] * 2,
            out_specs=pl.BlockSpec(memory_space=pltpu.MemorySpace.SMEM),
        )(x.reshape(rows, _LANE), z.reshape(rows, _LANE))
        return out[0, 0]

    # ---- Large-input path: gridded, per-block (8,128) partial sums. ----
    lane_pad = (-n) % _LANE
    if lane_pad:
        # TODO(synk): large non-128-multiple inputs still pay one full pad copy;
        # eliminating it needs a 1-D / manual-DMA tail path.
        x = jnp.pad(x, (0, lane_pad))
        z = jnp.pad(z, (0, lane_pad))
    rows = (n + lane_pad) // _LANE

    # >= 2 blocks so the "parallel" axis shards across v7x's two TensorCores.
    block_rows = min(_TARGET_BLOCK_ROWS, _round_up(-(-rows // 2), _ROW_ALIGN))
    num_blocks = -(-rows // block_rows)
    needs_mask = (lane_pad != 0) or (rows % block_rows != 0)

    x2d = x.reshape(rows, _LANE)  # metadata-only reshape when no padding
    z2d = z.reshape(rows, _LANE)

    kernel = _make_partial_kernel(real_label, fake_label, n, block_rows, needs_mask)
    in_spec = pl.BlockSpec((block_rows, _LANE), lambda i: (i, 0))

    partials = pl.pallas_call(
        kernel,
        out_shape=jax.ShapeDtypeStruct((num_blocks, _SUBLANE, _LANE), jnp.float32),
        grid_spec=pltpu.PrefetchScalarGridSpec(
            num_scalar_prefetch=0,
            grid=(num_blocks,),
            in_specs=[in_spec, in_spec],
            out_specs=pl.BlockSpec((1, _SUBLANE, _LANE), lambda i: (i, 0, 0)),
        ),
        compiler_params=pltpu.CompilerParams(
            dimension_semantics=("parallel",),
        ),
        cost_estimate=pl.CostEstimate(
            flops=12 * n,
            transcendentals=3 * n,
            bytes_accessed=n * (d_x.dtype.itemsize + d_g_z.dtype.itemsize)
            + num_blocks * _SUBLANE * _LANE * 4,
        ),
    )(x2d, z2d)

    # (mean_x + mean_z) / 2 == (sum_x + sum_z) / (2 * N)
    return jnp.sum(partials) * (0.5 / n)


def _reference(d_x, d_g_z, fake_label=0.0, real_label=1.0):
    def bce(t, y):
        t = t.astype(jnp.float32)
        return jnp.mean(jnp.maximum(t, 0.0) - t * y + jnp.log1p(jnp.exp(-jnp.abs(t))))

    return (bce(d_x, real_label) + bce(d_g_z, fake_label)) * 0.5


if __name__ == "__main__":
    key = jax.random.PRNGKey(0)
    k1, k2, k3, k4, k5, k6 = jax.random.split(key, 6)

    # PatchGAN-style map, f32, ragged size -> small fast path (pad + mask + SMEM scalar).
    d_x_a = jax.random.normal(k1, (2, 1, 30, 30), dtype=jnp.float32)
    d_g_z_a = jax.random.normal(k2, (2, 1, 30, 30), dtype=jnp.float32)
    loss_a = gan_discriminator_loss(d_x_a, d_g_z_a)
    jax.block_until_ready(loss_a)
    ref_a = _reference(d_x_a, d_g_z_a)
    assert jnp.allclose(loss_a, ref_a, rtol=1e-5, atol=1e-5), (loss_a, ref_a)

    # bf16 logits, exact tile multiple -> small fast path, mask-free, in-kernel cast.
    d_x_b = jax.random.normal(k3, (2, 4, 16, 16), dtype=jnp.bfloat16)
    d_g_z_b = jax.random.normal(k4, (2, 4, 16, 16), dtype=jnp.bfloat16)
    loss_b = gan_discriminator_loss(d_x_b, d_g_z_b)
    jax.block_until_ready(loss_b)
    ref_b = _reference(d_x_b, d_g_z_b)
    assert jnp.allclose(loss_b, ref_b, rtol=1e-5, atol=1e-5), (loss_b, ref_b)

    # Larger f32 map -> gridded path (2 parallel blocks), no pad, OOB-row mask.
    d_x_c = jax.random.normal(k5, (2, 1, 200, 200), dtype=jnp.float32)
    d_g_z_c = jax.random.normal(k6, (2, 1, 200, 200), dtype=jnp.float32)
    loss_c = gan_discriminator_loss(d_x_c, d_g_z_c)
    jax.block_until_ready(loss_c)
    ref_c = _reference(d_x_c, d_g_z_c)
    assert jnp.allclose(loss_c, ref_c, rtol=1e-5, atol=1e-5), (loss_c, ref_c)

    print("KERNEL_OK")
</pallas_src>

<mosaic_0001>
module attributes {stable_mosaic.version = 11 : i64} {
  func.func @kernel(%arg0: memref<16x128xf32, #tpu.memory_space<vmem>>, %arg1: memref<16x128xf32, #tpu.memory_space<vmem>>, %arg2: memref<1x1xf32, #tpu.memory_space<smem>>) attributes {dimension_semantics = [], scalar_prefetch = 0 : i64, scratch_operands = 0 : i64, tpu.core_type = #tpu.core_type<tc>} {
    %0 = tpu.iota {dimensions = array<i32: 0>} : vector<16x128xi32>
    %1 = tpu.iota {dimensions = array<i32: 1>} : vector<16x128xi32>
    %c128_i32 = arith.constant 128 : i32
    %2 = vector.broadcast %c128_i32 : i32 to vector<16x128xi32>
    %3 = arith.muli %0, %2 : vector<16x128xi32>
    %c0_i32 = arith.constant 0 : i32
    %4 = vector.broadcast %c0_i32 : i32 to vector<16x128xi32>
    %5 = arith.addi %4, %3 : vector<16x128xi32>
    %6 = arith.addi %5, %1 : vector<16x128xi32>
    %cst = arith.constant 0.000000e+00 : f32
    %7 = vector.broadcast %cst : f32 to vector<8x128xf32>
    %c0_i32_0 = arith.constant 0 : i32
    %c16_i32 = arith.constant 16 : i32
    %8 = arith.muli %c0_i32_0, %c16_i32 : i32
    %9 = tpu.assume_multiple %8, 16 : i32
    %10 = arith.index_cast %9 : i32 to index
    %c0 = arith.constant 0 : index
    %11 = vector.load %arg0[%10, %c0] : memref<16x128xf32, #tpu.memory_space<vmem>>, vector<16x128xf32>
    %12 = arith.index_cast %9 : i32 to index
    %c0_1 = arith.constant 0 : index
    %13 = vector.load %arg1[%12, %c0_1] : memref<16x128xf32, #tpu.memory_space<vmem>>, vector<16x128xf32>
    %14 = math.absf %11 : vector<16x128xf32>
    %cst_2 = arith.constant 0.000000e+00 : f32
    %15 = vector.broadcast %cst_2 : f32 to vector<16x128xf32>
    %16 = arith.subf %15, %14 : vector<16x128xf32>
    %17 = math.exp %16 : vector<16x128xf32>
    %18 = math.absf %13 : vector<16x128xf32>
    %cst_3 = arith.constant 0.000000e+00 : f32
    %19 = vector.broadcast %cst_3 : f32 to vector<16x128xf32>
    %20 = arith.subf %19, %18 : vector<16x128xf32>
    %21 = math.exp %20 : vector<16x128xf32>
    %cst_4 = arith.constant 0.000000e+00 : f32
    %22 = vector.broadcast %cst_4 : f32 to vector<16x128xf32>
    %23 = arith.maximumf %11, %22 : vector<16x128xf32>
    %cst_5 = arith.constant 1.000000e+00 : f32
    %24 = vector.broadcast %cst_5 : f32 to vector<16x128xf32>
    %25 = arith.mulf %11, %24 : vector<16x128xf32>
    %26 = arith.subf %23, %25 : vector<16x128xf32>
    %cst_6 = arith.constant 0.000000e+00 : f32
    %27 = vector.broadcast %cst_6 : f32 to vector<16x128xf32>
    %28 = arith.maximumf %13, %27 : vector<16x128xf32>
    %29 = arith.addf %26, %28 : vector<16x128xf32>
    %cst_7 = arith.constant 0.000000e+00 : f32
    %30 = vector.broadcast %cst_7 : f32 to vector<16x128xf32>
    %31 = arith.mulf %13, %30 : vector<16x128xf32>
    %32 = arith.subf %29, %31 : vector<16x128xf32>
    %cst_8 = arith.constant 1.000000e+00 : f32
    %33 = vector.broadcast %cst_8 : f32 to vector<16x128xf32>
    %34 = arith.addf %33, %17 : vector<16x128xf32>
    %cst_9 = arith.constant 1.000000e+00 : f32
    %35 = vector.broadcast %cst_9 : f32 to vector<16x128xf32>
    %36 = arith.addf %35, %21 : vector<16x128xf32>
    %37 = arith.mulf %34, %36 : vector<16x128xf32>
    %38 = math.log %37 : vector<16x128xf32>
    %39 = arith.addf %32, %38 : vector<16x128xf32>
    %c2048_i32 = arith.constant 2048 : i32
    %40 = arith.muli %c0_i32_0, %c2048_i32 : i32
    %41 = vector.broadcast %40 : i32 to vector<16x128xi32>
    %42 = arith.addi %6, %41 : vector<16x128xi32>
    %c1800_i32 = arith.constant 1800 : i32
    %43 = vector.broadcast %c1800_i32 : i32 to vector<16x128xi32>
    %44 = arith.cmpi slt, %42, %43 : vector<16x128xi32>
    %cst_10 = arith.constant 0.000000e+00 : f32
    %45 = vector.broadcast %cst_10 : f32 to vector<16x128xf32>
    %46 = arith.select %44, %39, %45 : vector<16x128xi1>, vector<16x128xf32>
    %47 = vector.extract_strided_slice %46 {offsets = [0, 0], sizes = [8, 128], strides = [1, 1]} : vector<16x128xf32> to vector<8x128xf32>
    %48 = arith.addf %7, %47 : vector<8x128xf32>
    %49 = vector.extract_strided_slice %46 {offsets = [8, 0], sizes = [8, 128], strides = [1, 1]} : vector<16x128xf32> to vector<8x128xf32>
    %50 = arith.addf %48, %49 : vector<8x128xf32>
    %c1_i32 = arith.constant 1 : i32
    %51 = vector.shape_cast %50 : vector<8x128xf32> to vector<1x8x128xf32>
    %cst_11 = arith.constant dense<0.000000e+00> : vector<1xf32>
    %52 = vector.multi_reduction <add>, %51, %cst_11 [1, 2] : vector<1x8x128xf32> to vector<1xf32>
    %53 = vector.shape_cast %52 : vector<1xf32> to vector<1x1x1xf32>
    %54 = vector.extract %53[0, 0, 0] : f32 from vector<1x1x1xf32>
    %cst_12 = arith.constant 2.77777785E-4 : f32
    %55 = arith.mulf %54, %cst_12 : f32
    %c0_13 = arith.constant 0 : index
    %c0_14 = arith.constant 0 : index
    %56 = memref.load %arg2[%c0_13, %c0_14] : memref<1x1xf32, #tpu.memory_space<smem>>
    memref.store %55, %arg2[%c0_13, %c0_14] : memref<1x1xf32, #tpu.memory_space<smem>>
    return
  }
}

</mosaic_0001>

<llo_original>
// kernel: gan_discriminator_loss.1
$region0: #{gan_discriminator_loss.1}
  #allocation0 [shape = 'u32[]', space=smem, size = 0x4, offset = 0x4, fixed_abs, tag = 'smem constant byte address 0x4 - core index']
  #allocation1 [shape = 'u32[144,128]{1,0:T(1,128)}', space=vmem, size = 0x12000, scoped, tag = 'internal scratch']
  %s0 = inlined_call_operand.vmem [shape: f32[16,128], index: 0, kind: input, shape index: {}]
  %s1 = inlined_call_operand.vmem [shape: f32[16,128], index: 1, kind: input, shape index: {}]
  %s2 = inlined_call_operand.hbm [shape: f32[1,1], index: 2, kind: output, shape index: {}]
  %s3 = sld [smem:[#allocation0]]
  $region18: #{gan_discriminator_loss.1} parent=0
    _
  %s5 = ssub.s32 1, %s3
  %s6 = scalar_select 0, %s5, %s3
  $region1: #{gan_discriminator_loss.1} parent=0
    #allocation2 [shape = 'u8[512]{0}', space=smem, size = 0x200, scoped, tag = 'output window, operand 0, single buffered']
    #allocation3 [shape = 's32[1]{0}', space=sflag, size = 0x4, scoped, tag = 'scoped memory for gan_discriminator_loss.1']
    %7 = vsyncpa [#allocation3], 0
    // Predicated region
    $region2: #{gan_discriminator_loss.1} parent=1 // pred_check
      _
    $region3: #{gan_discriminator_loss.1} parent=1 // pred_check_branch
      %9 = sbr.rel (0) target = $region5
    $region4: #{gan_discriminator_loss.1} parent=1 // pred_region
      _
    $region5: #{gan_discriminator_loss.1} parent=1 // pred_fallthru
      _
    // Predicated region
    $region6: #{gan_discriminator_loss.1} parent=1 // pred_check
      _
    $region7: #{gan_discriminator_loss.1} parent=1 // pred_check_branch
      %11 = sbr.rel (0) target = $region9
    $region8: #{gan_discriminator_loss.1} parent=1 // pred_region
      _
    $region9: #{gan_discriminator_loss.1} parent=1 // pred_fallthru
      _
    %v12 = vlaneseq
    %v13 = vshrl.u32 %v12, 7
    %v14 = vadd.s32 %v13, 8
    %v15 = vlaneseq
    %v16 = vand.u32 %v15, 127
    %v17 = vmul.u32 %v13, 128
    %v18 = vmul.u32 %v14, 128
    %v19 = vadd.s32 %v17, %v16
    %v20 = vadd.s32 %v18, %v16
    %v21 = vld [vmem:[%s0] sm:$0xff]
    %v22 = vld [vmem:[%s0 + $0x8] sm:$0xff]
    %v23 = vld [vmem:[%s1] sm:$0xff]
    %v24 = vld [vmem:[%s1 + $0x8] sm:$0xff]
    %v25 = vand.u32 2147483647, %v21
    %v26 = vand.u32 2147483647, %v22
    %v27 = vsub.f32 0.0, %v25
    %v28 = vsub.f32 0.0, %v26
    %v29 = vmul.f32 %v27, 1.442695
    %v30 = vpow.pop %v29
    %v31 = vmul.f32 %v28, 1.442695
    %v32 = vpow.pop %v31
    %v33 = vand.u32 2147483647, %v23
    %v34 = vand.u32 2147483647, %v24
    %v35 = vsub.f32 0.0, %v33
    %v36 = vsub.f32 0.0, %v34
    %v37 = vmul.f32 %v35, 1.442695
    %v38 = vpow.pop %v37
    %v39 = vmul.f32 %v36, 1.442695
    %v40 = vpow.pop %v39
    %v41 = vmax.f32 %v21, 0.0
    %v42 = vmax.f32 %v22, 0.0
    %v43 = vsub.f32 %v41, %v21
    %v44 = vsub.f32 %v42, %v22
    %v45 = vmax.f32 %v23, 0.0
    %v46 = vmax.f32 %v24, 0.0
    %v47 = vadd.f32 %v43, %v45
    %v48 = vadd.f32 %v44, %v46
    %v49 = vmul.f32 %v23, 0.0
    %v50 = vmul.f32 %v24, 0.0
    %v51 = vsub.f32 %v47, %v49
    %v52 = vsub.f32 %v48, %v50
    %v53 = vadd.f32 %v30, 1.0
    %v54 = vadd.f32 %v32, 1.0
    %v55 = vadd.f32 %v38, 1.0
    %v56 = vadd.f32 %v40, 1.0
    %v57 = vmul.f32 %v53, %v55
    %v58 = vmul.f32 %v54, %v56
    %v59 = vlog2.pop %v57
    %v60 = vmul.f32 %v59, 0.6931472
    %v61 = vlog2.pop %v58
    %v62 = vmul.f32 %v61, 0.6931472
    %v63 = vadd.f32 %v51, %v60
    %v64 = vadd.f32 %v52, %v62
    %vm65 = vcmp.lt.s32.totalorder %v19, 1800
    %vm66 = vcmp.lt.s32.totalorder %v20, 1800
    %v67 = vsel %vm65, %v63, 0.0
    %v68 = vsel %vm66, %v64, 0.0
    %v69 = vadd.f32 %v67, 0.0
    %v70 = vadd.f32 %v69, %v68
    %71 = vadd.xlane.f32.xlu0 %v70
    %v72 = vpop.xlane.xlu0 %71
    %v73 = vrot.slane %v72, 4
    %v74 = vadd.f32 %v72, %v73
    %v75 = vrot.slane %v74, 2
    %v76 = vadd.f32 %v74, %v75
    %v77 = vrot.slane %v76, 1
    %v78 = vadd.f32 %v76, %v77
    %s79 = vtos %v78
    %s80 = smul.f32 %s79, 0.00027777778
    %s81 = scalar_lea.smem [#allocation2], 0
    %82 = sst [smem:[%s81]] %s80
    // Predicated region
    $region10: #{gan_discriminator_loss.1} parent=1 // pred_check
      _
    $region11: #{gan_discriminator_loss.1} parent=1 // pred_check_branch
      %84 = sbr.rel (0) target = $region13
    $region12: #{gan_discriminator_loss.1} parent=1 // pred_region
      %s86 = ssub.s32 16, 16
      %87 = vsyncadd [#allocation3], %s86
      %90 = dma.smem_to_hbm [#allocation2], 16, %s2, [#allocation3]
    $region13: #{gan_discriminator_loss.1} parent=1 // pred_fallthru
      _
    // Predicated region
    $region14: #{gan_discriminator_loss.1} parent=1 // pred_check
      _
    $region15: #{gan_discriminator_loss.1} parent=1 // pred_check_branch
      %92 = sbr.rel (0) target = $region17
    $region16: #{gan_discriminator_loss.1} parent=1 // pred_region
      %93 = dma.done [#allocation3], 16
    $region17: #{gan_discriminator_loss.1} parent=1 // pred_fallthru
      _
    %94 = sfence
    %95 = vsyncpa [#allocation3], 1

</llo_original>
